<compile_context>
chip_gen: v6e
topology: v6e:2x2x1
jax: 0.10.0
libtpu: 0.0.40
codegen_flags: <defaults>
</compile_context>

<pallas_src>
import functools
import math

import jax
import jax.numpy as jnp
from jax.experimental import pallas as pl
from jax.experimental.pallas import tpu as pltpu

LINEAR_HIDDEN = 20        # hp.linear_hidden
LANE = 128                # pad small matmul output dims to lane width (NOT 256)
NEG_BIG = -1e30           # softmax mask for padded hidden lanes
VMEM_LIMIT = 32 * 1024 * 1024   # explicit scoped-VMEM limit (safe on v5e/v6e/v7x)
VMEM_BUDGET = 28 * 1024 * 1024  # tiling budget, leaves headroom under the limit


def _round_up(n, m):
    return ((n + m - 1) // m) * m


def _mlp_kernel(x_ref, w1_ref, b1_ref, w2_ref, b2_ref, o_ref):
    # fc1: cast the f32 activation tile to bf16 in-kernel (free vs. the DMA time),
    # bf16 x bf16 MXU matmul with f32 accumulation, f32 bias (padded lanes = -1e30).
    x_bf16 = x_ref[...].astype(jnp.bfloat16)
    h = jnp.dot(x_bf16, w1_ref[...],
                preferred_element_type=jnp.float32) + b1_ref[...]

    # Numerically stable softmax over the hidden dim, f32 throughout.
    # Padded lanes carry bias -1e30 => exp() == 0, denominator unchanged.
    m = jnp.max(h, axis=-1, keepdims=True)
    e = jnp.exp(h - m)
    denom = jnp.sum(e, axis=-1, keepdims=True)
    p = e * pl.reciprocal(denom, approx=True)   # EUP vrcp slot, frees the VALU

    # fc2: tiny (TB,128)@(128,128) matmul; keep p in f32 (compute is free in this
    # memory-bound regime, improves accuracy). Store the result as bf16 to halve
    # the (mostly padding) output writeback; real lanes are sliced in the wrapper.
    out = jnp.dot(p, w2_ref[...], preferred_element_type=jnp.float32) + b2_ref[...]
    o_ref[...] = out.astype(o_ref.dtype)


def _pick_tile_b(batch, f_in, h_pad, o_pad):
    """Largest multiple-of-8 batch tile whose double-buffered f32-x / bf16-out
    blocks plus the resident weights fit the 28 MiB budget (safe on v7x's smaller
    VMEM); capped so v7x's 2 TensorCores both get a tile when batch is large."""
    resident = f_in * h_pad * 2 + h_pad * o_pad * 4 + (h_pad + o_pad) * 4
    per_row = 2 * (f_in * 4 + o_pad * 2)        # double-buffered f32 in + bf16 out
    avail = max(VMEM_BUDGET - resident, per_row * 8)
    tile = (avail // per_row) // 8 * 8
    tile = max(8, min(2048, tile))
    if batch >= 16:
        # v7x megacore: guarantee >= 2 grid steps so both TCs are used
        tile = min(tile, _round_up((batch + 1) // 2, 8))
    return min(tile, _round_up(batch, 8))


def prepare_params(w1, b1, w2, b2):
    """Lane-pad hidden/output dims to 128; w1 in bf16 (MXU), w2/biases in f32."""
    f_in, hidden = w1.shape
    _, out_features = w2.shape
    h_pad = _round_up(hidden, LANE)
    o_pad = _round_up(out_features, LANE)

    w1p = jnp.zeros((f_in, h_pad), jnp.bfloat16).at[:, :hidden].set(
        w1.astype(jnp.bfloat16))
    # padded hidden lanes get a huge negative bias so exp() == 0 in the softmax
    b1p = jnp.full((1, h_pad), NEG_BIG, jnp.float32).at[:, :hidden].set(
        b1.reshape(1, -1).astype(jnp.float32))
    w2p = jnp.zeros((h_pad, o_pad), jnp.float32).at[:hidden, :out_features].set(
        w2.astype(jnp.float32))
    b2p = jnp.zeros((1, o_pad), jnp.float32).at[:, :out_features].set(
        b2.reshape(1, -1).astype(jnp.float32))
    return w1p, b1p, w2p, b2p


@functools.partial(jax.jit, static_argnames=("out_features",))
def fully_connect_net_forward(x, w1p, b1p, w2p, b2p, out_features):
    """x: any shape with leading batch dim; params already padded via prepare_params."""
    batch = x.shape[0]
    # nn.Flatten on f32 — reshape is free; NO dtype round trip in the wrapper.
    x2d = x.astype(jnp.float32).reshape(batch, -1)
    f_in = x2d.shape[1]
    h_pad = w1p.shape[1]
    o_pad = w2p.shape[1]

    tile_b = _pick_tile_b(batch, f_in, h_pad, o_pad)
    grid = (pl.cdiv(batch, tile_b),)   # ragged last block handled by Pallas; no jnp.pad

    resident = lambda shape: pl.BlockSpec(shape, lambda i: (0,) * len(shape))

    out = pl.pallas_call(
        _mlp_kernel,
        out_shape=jax.ShapeDtypeStruct((batch, o_pad), jnp.bfloat16),
        grid=grid,
        in_specs=[
            pl.BlockSpec((tile_b, f_in), lambda i: (i, 0)),  # batch-tiled, double-buffered
            resident(w1p.shape),                             # weights stay VMEM-resident
            resident(b1p.shape),
            resident(w2p.shape),
            resident(b2p.shape),
        ],
        out_specs=pl.BlockSpec((tile_b, o_pad), lambda i: (i, 0)),
        compiler_params=pltpu.CompilerParams(
            # batch tiles are independent -> shard across v7x's 2 TCs; harmless on v5e/v6e
            dimension_semantics=("parallel",),
            vmem_limit_bytes=VMEM_LIMIT,
        ),
    )(x2d, w1p, b1p, w2p, b2p)

    # slice off the padded output lanes and return f32 (matches the PyTorch module)
    return out[:, :out_features].astype(jnp.float32)


def init_params(key, in_features, hidden, out_features):
    """Deterministic init mimicking PyTorch nn.Linear default (uniform ±1/sqrt(fan_in))."""
    k1, k2, k3, k4 = jax.random.split(key, 4)
    bound1 = 1.0 / math.sqrt(in_features)
    bound2 = 1.0 / math.sqrt(hidden)
    # stored as (in, out), i.e. W.T relative to PyTorch's (out, in)
    w1 = jax.random.uniform(k1, (in_features, hidden), jnp.float32, -bound1, bound1)
    b1 = jax.random.uniform(k2, (1, hidden), jnp.float32, -bound1, bound1)
    w2 = jax.random.uniform(k3, (hidden, out_features), jnp.float32, -bound2, bound2)
    b2 = jax.random.uniform(k4, (1, out_features), jnp.float32, -bound2, bound2)
    return w1, b1, w2, b2


def reference_forward(x, w1, b1, w2, b2):
    xf = x.astype(jnp.float32).reshape(x.shape[0], -1)
    h = xf @ w1 + b1.reshape(1, -1)
    p = jax.nn.softmax(h, axis=1)
    return p @ w2 + b2.reshape(1, -1)


if __name__ == "__main__":
    key = jax.random.PRNGKey(0)
    kx, kp = jax.random.split(key)

    batch, C, H, W = 2, 4, 16, 16
    in_features = C * H * W          # 1024 after nn.Flatten
    out_features = 3                 # hp.B_classes

    x = jax.random.normal(kx, (batch, C, H, W), jnp.float32)
    w1, b1, w2, b2 = init_params(kp, in_features, LINEAR_HIDDEN, out_features)
    w1p, b1p, w2p, b2p = prepare_params(w1, b1, w2, b2)

    out = fully_connect_net_forward(x, w1p, b1p, w2p, b2p, out_features)
    out = jax.block_until_ready(out)

    ref = reference_forward(x, w1, b1, w2, b2)
    assert out.shape == (batch, out_features)
    # bf16 fc1 inputs + approx reciprocal + bf16 output store -> relaxed tolerance
    assert jnp.allclose(out, ref, atol=2e-2, rtol=2e-2), "mismatch vs reference"

    print("KERNEL_OK")
</pallas_src>

<mosaic_0001>
module attributes {stable_mosaic.version = 11 : i64} {
  func.func @_mlp_kernel(%arg0: i32, %arg1: memref<8x1024xf32, #tpu.memory_space<vmem>>, %arg2: memref<1024x128xbf16, #tpu.memory_space<vmem>>, %arg3: memref<1x128xf32, #tpu.memory_space<vmem>>, %arg4: memref<128x128xf32, #tpu.memory_space<vmem>>, %arg5: memref<1x128xf32, #tpu.memory_space<vmem>>, %arg6: memref<8x128xbf16, #tpu.memory_space<vmem>>) attributes {dimension_semantics = [#tpu.dimension_semantics<parallel>], iteration_bounds = array<i64: 1>, scalar_prefetch = 0 : i64, scratch_operands = 0 : i64, tpu.core_type = #tpu.core_type<tc>, window_params = [{transform_indices = @transform_0, window_bounds = array<i64: 8, 1024>}, {pipeline_mode = #tpu.pipeline_mode<synchronous>, transform_indices = @transform_1, window_bounds = array<i64: 1024, 128>}, {pipeline_mode = #tpu.pipeline_mode<synchronous>, transform_indices = @transform_2, window_bounds = array<i64: 1, 128>}, {pipeline_mode = #tpu.pipeline_mode<synchronous>, transform_indices = @transform_3, window_bounds = array<i64: 128, 128>}, {pipeline_mode = #tpu.pipeline_mode<synchronous>, transform_indices = @transform_4, window_bounds = array<i64: 1, 128>}, {transform_indices = @transform_5, window_bounds = array<i64: 8, 128>}]} {
    %c0 = arith.constant 0 : index
    %c0_0 = arith.constant 0 : index
    %0 = vector.load %arg1[%c0, %c0_0] : memref<8x1024xf32, #tpu.memory_space<vmem>>, vector<8x1024xf32>
    %1 = arith.truncf %0 : vector<8x1024xf32> to vector<8x1024xbf16>
    %c0_1 = arith.constant 0 : index
    %c0_2 = arith.constant 0 : index
    %2 = vector.load %arg2[%c0_1, %c0_2] : memref<1024x128xbf16, #tpu.memory_space<vmem>>, vector<1024x128xbf16>
    %cst = arith.constant dense<0.000000e+00> : vector<8x128xf32>
    %3 = tpu.matmul %1, %2, %cst {dimension_numbers = #tpu.dot_dimension_numbers<[1], [0], [0], [1], [0, 0, 1, 1], [], []>} : vector<8x1024xbf16>, vector<1024x128xbf16>, vector<8x128xf32> -> vector<8x128xf32>
    %c0_3 = arith.constant 0 : index
    %c0_4 = arith.constant 0 : index
    %4 = vector.load %arg3[%c0_3, %c0_4] : memref<1x128xf32, #tpu.memory_space<vmem>>, vector<1x128xf32>
    %5 = vector.broadcast %4 : vector<1x128xf32> to vector<8x128xf32>
    %6 = arith.addf %3, %5 : vector<8x128xf32>
    %cst_5 = arith.constant dense<0xFF800000> : vector<8xf32>
    %7 = vector.multi_reduction <maximumf>, %6, %cst_5 [1] : vector<8x128xf32> to vector<8xf32>
    %8 = vector.shape_cast %7 : vector<8xf32> to vector<8x1xf32>
    %9 = vector.broadcast %8 : vector<8x1xf32> to vector<8x128xf32>
    %10 = arith.subf %6, %9 : vector<8x128xf32>
    %11 = math.exp %10 : vector<8x128xf32>
    %cst_6 = arith.constant dense<0.000000e+00> : vector<8xf32>
    %12 = vector.multi_reduction <add>, %11, %cst_6 [1] : vector<8x128xf32> to vector<8xf32>
    %13 = vector.shape_cast %12 : vector<8xf32> to vector<8x1xf32>
    %14 = tpu.reciprocal %13 {approx = true} : vector<8x1xf32> -> vector<8x1xf32>
    %15 = vector.broadcast %14 : vector<8x1xf32> to vector<8x128xf32>
    %16 = arith.mulf %11, %15 : vector<8x128xf32>
    %c0_7 = arith.constant 0 : index
    %c0_8 = arith.constant 0 : index
    %17 = vector.load %arg4[%c0_7, %c0_8] : memref<128x128xf32, #tpu.memory_space<vmem>>, vector<128x128xf32>
    %cst_9 = arith.constant dense<0.000000e+00> : vector<8x128xf32>
    %18 = tpu.matmul %16, %17, %cst_9 {dimension_numbers = #tpu.dot_dimension_numbers<[1], [0], [0], [1], [0, 0, 1, 1], [], []>} : vector<8x128xf32>, vector<128x128xf32>, vector<8x128xf32> -> vector<8x128xf32>
    %c0_10 = arith.constant 0 : index
    %c0_11 = arith.constant 0 : index
    %19 = vector.load %arg5[%c0_10, %c0_11] : memref<1x128xf32, #tpu.memory_space<vmem>>, vector<1x128xf32>
    %20 = vector.broadcast %19 : vector<1x128xf32> to vector<8x128xf32>
    %21 = arith.addf %18, %20 : vector<8x128xf32>
    %22 = arith.truncf %21 : vector<8x128xf32> to vector<8x128xbf16>
    %c0_12 = arith.constant 0 : index
    %c0_13 = arith.constant 0 : index
    %23 = vector.load %arg6[%c0_12, %c0_13] : memref<8x128xbf16, #tpu.memory_space<vmem>>, vector<8x128xbf16>
    tpu.vector_store %arg6[%c0_12, %c0_13], %22 {strides = array<i32>} : memref<8x128xbf16, #tpu.memory_space<vmem>>, vector<8x128xbf16>,
    return
  }
  func.func @transform_0(%arg0: i32) -> (i32, i32) {
    %c0_i32 = arith.constant 0 : i32
    %c0_i32_0 = arith.constant 0 : i32
    return %arg0, %c0_i32 : i32, i32
  }
  func.func @transform_1(%arg0: i32) -> (i32, i32) {
    %c0_i32 = arith.constant 0 : i32
    %c0_i32_0 = arith.constant 0 : i32
    %c0_i32_1 = arith.constant 0 : i32
    return %c0_i32, %c0_i32_0 : i32, i32
  }
  func.func @transform_2(%arg0: i32) -> (i32, i32) {
    %c0_i32 = arith.constant 0 : i32
    %c0_i32_0 = arith.constant 0 : i32
    %c0_i32_1 = arith.constant 0 : i32
    return %c0_i32, %c0_i32_0 : i32, i32
  }
  func.func @transform_3(%arg0: i32) -> (i32, i32) {
    %c0_i32 = arith.constant 0 : i32
    %c0_i32_0 = arith.constant 0 : i32
    %c0_i32_1 = arith.constant 0 : i32
    return %c0_i32, %c0_i32_0 : i32, i32
  }
  func.func @transform_4(%arg0: i32) -> (i32, i32) {
    %c0_i32 = arith.constant 0 : i32
    %c0_i32_0 = arith.constant 0 : i32
    %c0_i32_1 = arith.constant 0 : i32
    return %c0_i32, %c0_i32_0 : i32, i32
  }
  func.func @transform_5(%arg0: i32) -> (i32, i32) {
    %c0_i32 = arith.constant 0 : i32
    %c0_i32_0 = arith.constant 0 : i32
    return %arg0, %c0_i32 : i32, i32
  }
}

</mosaic_0001>

<llo_original>
// kernel: fully_connect_net_forward.1
$region0: #{fully_connect_net_forward.1}
  #allocation0 [shape = 'u32[]', space=smem, size = 0x4, offset = 0x4, fixed_abs, tag = 'smem constant byte address 0x4 - core index']
  #allocation1 [shape = 'u32[144,128]{1,0:T(1,128)}', space=vmem, size = 0x12000, scoped, tag = 'internal scratch']
  %s0 = inlined_call_operand.vmem [shape: f32[2,1024], index: 0, kind: input, shape index: {}]
  %s1 = inlined_call_operand.hbm [shape: bf16[1024,128], index: 1, kind: input, shape index: {}]
  %s2 = inlined_call_operand.vmem [shape: f32[1,128], index: 2, kind: input, shape index: {}]
  %s3 = inlined_call_operand.vmem [shape: f32[128,128], index: 3, kind: input, shape index: {}]
  %s4 = inlined_call_operand.vmem [shape: f32[1,128], index: 4, kind: input, shape index: {}]
  %s5 = inlined_call_operand.vmem [shape: bf16[2,128], index: 5, kind: output, shape index: {}]
  %s6 = sld [smem:[#allocation0]]
  $region64: #{fully_connect_net_forward.1} parent=0
    _
  %s8 = ssub.s32 1, %s6
  %s9 = scalar_select 0, %s8, %s6
  $region1: #{fully_connect_net_forward.1} parent=0
    #allocation2 [shape = 'u8[262144]{0}', space=vmem, size = 0x40000, scoped, tag = 'input window, operand 1, single buffered']
    #allocation3 [shape = 's32[1]{0}', space=sflag, size = 0x4, scoped, tag = 'scoped memory for fully_connect_net_forward.1']
    #allocation4 [shape = 'u8[2048]{0}', space=vmem, size = 0x800, scoped, tag = 'output window, operand 0, single buffered']
    %10 = vsyncpa [#allocation3], 0
    // Predicated region
    $region2: #{fully_connect_net_forward.1} parent=1 // pred_check
      _
    $region3: #{fully_connect_net_forward.1} parent=1 // pred_check_branch
      %12 = sbr.rel (0) target = $region5
    $region4: #{fully_connect_net_forward.1} parent=1 // pred_region
      _
    $region5: #{fully_connect_net_forward.1} parent=1 // pred_fallthru
      _
    // Predicated region
    $region6: #{fully_connect_net_forward.1} parent=1 // pred_check
      _
    $region7: #{fully_connect_net_forward.1} parent=1 // pred_check_branch
      %14 = sbr.rel (0) target = $region9
    $region8: #{fully_connect_net_forward.1} parent=1 // pred_region
      %s16 = ssub.s32 8192, 8192
      %17 = vsyncadd [#allocation3], %s16
      %s18 = sshll.u32 [#allocation2], 4
      %s19 = int_to_ptr.vmem [resolvable:$true] %s18
      %24 = dma.hbm_to_vmem [thread:$0]  %s1, 8192, %s19, [#allocation3], 64, 64, 4
    $region9: #{fully_connect_net_forward.1} parent=1 // pred_fallthru
      _
    // Predicated region
    $region10: #{fully_connect_net_forward.1} parent=1 // pred_check
      _
    $region11: #{fully_connect_net_forward.1} parent=1 // pred_check_branch
      %26 = sbr.rel (0) target = $region13
    $region12: #{fully_connect_net_forward.1} parent=1 // pred_region
      _
    $region13: #{fully_connect_net_forward.1} parent=1 // pred_fallthru
      _
    // Predicated region
    $region14: #{fully_connect_net_forward.1} parent=1 // pred_check
      _
    $region15: #{fully_connect_net_forward.1} parent=1 // pred_check_branch
      %28 = sbr.rel (0) target = $region17
    $region16: #{fully_connect_net_forward.1} parent=1 // pred_region
      _
    $region17: #{fully_connect_net_forward.1} parent=1 // pred_fallthru
      _
    // Predicated region
    $region18: #{fully_connect_net_forward.1} parent=1 // pred_check
      _
    $region19: #{fully_connect_net_forward.1} parent=1 // pred_check_branch
      %30 = sbr.rel (0) target = $region21
    $region20: #{fully_connect_net_forward.1} parent=1 // pred_region
      _
    $region21: #{fully_connect_net_forward.1} parent=1 // pred_fallthru
      _
    // Predicated region
    $region22: #{fully_connect_net_forward.1} parent=1 // pred_check
      _
    $region23: #{fully_connect_net_forward.1} parent=1 // pred_check_branch
      %32 = sbr.rel (0) target = $region25
    $region24: #{fully_connect_net_forward.1} parent=1 // pred_region
      %33 = dma.done [#allocation3], 8192
    $region25: #{fully_connect_net_forward.1} parent=1 // pred_fallthru
      _
    %v35 = vld [vmem:[%s0] sm:$0xff]
    %v36 = vld [vmem:[%s0 + $0x8] sm:$0xff]
    %v37 = vld [vmem:[%s0 + $0x10] sm:$0xff]
    %v38 = vld [vmem:[%s0 + $0x18] sm:$0xff]
    %v39 = vld [vmem:[%s0 + $0x20] sm:$0xff]
    %v40 = vld [vmem:[%s0 + $0x28] sm:$0xff]
    %v41 = vld [vmem:[%s0 + $0x30] sm:$0xff]
    %v42 = vld [vmem:[%s0 + $0x38] sm:$0xff]
    %v51 = vcombine.low %v35, %v37
    %v52 = vcombine.high %v35, %v37
    %v53 = vcombine.low %v39, %v41
    %v54 = vcombine.high %v39, %v41
    %v56 = vunpack.c.l.s4 1983009808
    %v57 = vunpack.c.0.s8 %v56
    %v58 = vlaneseq
    %v59 = vshrl.u32 %v58, 7
    %v60 = vsub.s32 %v57, %v59
    %v61 = vrot.slane %v51, %v60
    %v63 = vunpack.c.l.s4 1983009808
    %v64 = vunpack.c.0.s8 %v63
    %v65 = vlaneseq
    %v66 = vshrl.u32 %v65, 7
    %v67 = vsub.s32 %v64, %v66
    %v68 = vrot.slane %v52, %v67
    %v70 = vunpack.c.l.s4 1983009808
    %v71 = vunpack.c.0.s8 %v70
    %v72 = vlaneseq
    %v73 = vshrl.u32 %v72, 7
    %v74 = vsub.s32 %v71, %v73
    %v75 = vrot.slane %v53, %v74
    %v77 = vunpack.c.l.s4 1983009808
    %v78 = vunpack.c.0.s8 %v77
    %v79 = vlaneseq
    %v80 = vshrl.u32 %v79, 7
    %v81 = vsub.s32 %v78, %v80
    %v82 = vrot.slane %v54, %v81
    %v83 = vcombine.low %v61, %v75
    %v84 = vcombine.high %v61, %v75
    %v85 = vcombine.low %v68, %v82
    %v86 = vcombine.high %v68, %v82
    %v87 = vcombine.low %v36, %v38
    %v88 = vcombine.high %v36, %v38
    %v89 = vcombine.low %v40, %v42
    %v90 = vcombine.high %v40, %v42
    %v92 = vunpack.c.l.s4 1983009808
    %v93 = vunpack.c.0.s8 %v92
    %v94 = vlaneseq
    %v95 = vshrl.u32 %v94, 7
    %v96 = vsub.s32 %v93, %v95
    %v97 = vrot.slane %v87, %v96
    %v99 = vunpack.c.l.s4 1983009808
    %v100 = vunpack.c.0.s8 %v99
    %v101 = vlaneseq
    %v102 = vshrl.u32 %v101, 7
    %v103 = vsub.s32 %v100, %v102
    %v104 = vrot.slane %v88, %v103
    %v106 = vunpack.c.l.s4 1983009808
    %v107 = vunpack.c.0.s8 %v106
    %v108 = vlaneseq
    %v109 = vshrl.u32 %v108, 7
    %v110 = vsub.s32 %v107, %v109
    %v111 = vrot.slane %v89, %v110
    %v113 = vunpack.c.l.s4 1983009808
    %v114 = vunpack.c.0.s8 %v113
    %v115 = vlaneseq
    %v116 = vshrl.u32 %v115, 7
    %v117 = vsub.s32 %v114, %v116
    %v118 = vrot.slane %v90, %v117
    %v119 = vcombine.low %v97, %v111
    %v120 = vcombine.high %v97, %v111
    %v121 = vcombine.low %v104, %v118
    %v122 = vcombine.high %v104, %v118
    %v131 = vpack.c.bf16 %v83, %v83
    %v132 = vpack.c.bf16 %v84, %v84
    %v133 = vpack.c.bf16 %v85, %v85
    %v134 = vpack.c.bf16 %v86, %v86
    %v135 = vpack.c.bf16 %v119, %v119
    %v136 = vpack.c.bf16 %v120, %v120
    %v137 = vpack.c.bf16 %v121, %v121
    %v138 = vpack.c.bf16 %v122, %v122
    %v139 = vld [vmem:[#allocation2] sm:$0xf]
    %v140 = vld [vmem:[#allocation2 + $0x4] sm:$0xf]
    %v141 = vld [vmem:[#allocation2 + $0x8] sm:$0xf]
    %v142 = vld [vmem:[#allocation2 + $0xc] sm:$0xf]
    %v143 = vld [vmem:[#allocation2 + $0x10] sm:$0xf]
    %v144 = vld [vmem:[#allocation2 + $0x14] sm:$0xf]
    %v145 = vld [vmem:[#allocation2 + $0x18] sm:$0xf]
    %v146 = vld [vmem:[#allocation2 + $0x1c] sm:$0xf]
    %v147 = vld [vmem:[#allocation2 + $0x20] sm:$0xf]
    %v148 = vld [vmem:[#allocation2 + $0x24] sm:$0xf]
    %v149 = vld [vmem:[#allocation2 + $0x28] sm:$0xf]
    %v150 = vld [vmem:[#allocation2 + $0x2c] sm:$0xf]
    %v151 = vld [vmem:[#allocation2 + $0x30] sm:$0xf]
    %v152 = vld [vmem:[#allocation2 + $0x34] sm:$0xf]
    %v153 = vld [vmem:[#allocation2 + $0x38] sm:$0xf]
    %v154 = vld [vmem:[#allocation2 + $0x3c] sm:$0xf]
    %v155 = vld [vmem:[#allocation2 + $0x40] sm:$0xf]
    %v156 = vld [vmem:[#allocation2 + $0x44] sm:$0xf]
    %v157 = vld [vmem:[#allocation2 + $0x48] sm:$0xf]
    %v158 = vld [vmem:[#allocation2 + $0x4c] sm:$0xf]
    %v159 = vld [vmem:[#allocation2 + $0x50] sm:$0xf]
    %v160 = vld [vmem:[#allocation2 + $0x54] sm:$0xf]
    %v161 = vld [vmem:[#allocation2 + $0x58] sm:$0xf]
    %v162 = vld [vmem:[#allocation2 + $0x5c] sm:$0xf]
    %v163 = vld [vmem:[#allocation2 + $0x60] sm:$0xf]
    %v164 = vld [vmem:[#allocation2 + $0x64] sm:$0xf]
    %v165 = vld [vmem:[#allocation2 + $0x68] sm:$0xf]
    %v166 = vld [vmem:[#allocation2 + $0x6c] sm:$0xf]
    %v167 = vld [vmem:[#allocation2 + $0x70] sm:$0xf]
    %v168 = vld [vmem:[#allocation2 + $0x74] sm:$0xf]
    %v169 = vld [vmem:[#allocation2 + $0x78] sm:$0xf]
    %v170 = vld [vmem:[#allocation2 + $0x7c] sm:$0xf]
    %v171 = vld [vmem:[#allocation2 + $0x80] sm:$0xf]
    %v172 = vld [vmem:[#allocation2 + $0x84] sm:$0xf]
    %v173 = vld [vmem:[#allocation2 + $0x88] sm:$0xf]
    %v174 = vld [vmem:[#allocation2 + $0x8c] sm:$0xf]
    %v175 = vld [vmem:[#allocation2 + $0x90] sm:$0xf]
    %v176 = vld [vmem:[#allocation2 + $0x94] sm:$0xf]
    %v177 = vld [vmem:[#allocation2 + $0x98] sm:$0xf]
    %v178 = vld [vmem:[#allocation2 + $0x9c] sm:$0xf]
    %v179 = vld [vmem:[#allocation2 + $0xa0] sm:$0xf]
    %v180 = vld [vmem:[#allocation2 + $0xa4] sm:$0xf]
    %v181 = vld [vmem:[#allocation2 + $0xa8] sm:$0xf]
    %v182 = vld [vmem:[#allocation2 + $0xac] sm:$0xf]
    %v183 = vld [vmem:[#allocation2 + $0xb0] sm:$0xf]
    %v184 = vld [vmem:[#allocation2 + $0xb4] sm:$0xf]
    %v185 = vld [vmem:[#allocation2 + $0xb8] sm:$0xf]
    %v186 = vld [vmem:[#allocation2 + $0xbc] sm:$0xf]
    %v187 = vld [vmem:[#allocation2 + $0xc0] sm:$0xf]
    %v188 = vld [vmem:[#allocation2 + $0xc4] sm:$0xf]
    %v189 = vld [vmem:[#allocation2 + $0xc8] sm:$0xf]
    %v190 = vld [vmem:[#allocation2 + $0xcc] sm:$0xf]
    %v191 = vld [vmem:[#allocation2 + $0xd0] sm:$0xf]
    %v192 = vld [vmem:[#allocation2 + $0xd4] sm:$0xf]
    %v193 = vld [vmem:[#allocation2 + $0xd8] sm:$0xf]
    %v194 = vld [vmem:[#allocation2 + $0xdc] sm:$0xf]
    %v195 = vld [vmem:[#allocation2 + $0xe0] sm:$0xf]
    %v196 = vld [vmem:[#allocation2 + $0xe4] sm:$0xf]
    %v197 = vld [vmem:[#allocation2 + $0xe8] sm:$0xf]
    %v198 = vld [vmem:[#allocation2 + $0xec] sm:$0xf]
    %v199 = vld [vmem:[#allocation2 + $0xf0] sm:$0xf]
    %v200 = vld [vmem:[#allocation2 + $0xf4] sm:$0xf]
    %v201 = vld [vmem:[#allocation2 + $0xf8] sm:$0xf]
    %v202 = vld [vmem:[#allocation2 + $0xfc] sm:$0xf]
    %v203 = vld [vmem:[#allocation2 + $0x100] sm:$0xf]
    %v204 = vld [vmem:[#allocation2 + $0x104] sm:$0xf]
    %v205 = vld [vmem:[#allocation2 + $0x108] sm:$0xf]
    %v206 = vld [vmem:[#allocation2 + $0x10c] sm:$0xf]
    %v207 = vld [vmem:[#allocation2 + $0x110] sm:$0xf]
    %v208 = vld [vmem:[#allocation2 + $0x114] sm:$0xf]
    %v209 = vld [vmem:[#allocation2 + $0x118] sm:$0xf]
    %v210 = vld [vmem:[#allocation2 + $0x11c] sm:$0xf]
    %v211 = vld [vmem:[#allocation2 + $0x120] sm:$0xf]
    %v212 = vld [vmem:[#allocation2 + $0x124] sm:$0xf]
    %v213 = vld [vmem:[#allocation2 + $0x128] sm:$0xf]
    %v214 = vld [vmem:[#allocation2 + $0x12c] sm:$0xf]
    %v215 = vld [vmem:[#allocation2 + $0x130] sm:$0xf]
    %v216 = vld [vmem:[#allocation2 + $0x134] sm:$0xf]
    %v217 = vld [vmem:[#allocation2 + $0x138] sm:$0xf]
    %v218 = vld [vmem:[#allocation2 + $0x13c] sm:$0xf]
    %v219 = vld [vmem:[#allocation2 + $0x140] sm:$0xf]
    %v220 = vld [vmem:[#allocation2 + $0x144] sm:$0xf]
    %v221 = vld [vmem:[#allocation2 + $0x148] sm:$0xf]
    %v222 = vld [vmem:[#allocation2 + $0x14c] sm:$0xf]
    %v223 = vld [vmem:[#allocation2 + $0x150] sm:$0xf]
    %v224 = vld [vmem:[#allocation2 + $0x154] sm:$0xf]
    %v225 = vld [vmem:[#allocation2 + $0x158] sm:$0xf]
    %v226 = vld [vmem:[#allocation2 + $0x15c] sm:$0xf]
    %v227 = vld [vmem:[#allocation2 + $0x160] sm:$0xf]
    %v228 = vld [vmem:[#allocation2 + $0x164] sm:$0xf]
    %v229 = vld [vmem:[#allocation2 + $0x168] sm:$0xf]
    %v230 = vld [vmem:[#allocation2 + $0x16c] sm:$0xf]
    %v231 = vld [vmem:[#allocation2 + $0x170] sm:$0xf]
    %v232 = vld [vmem:[#allocation2 + $0x174] sm:$0xf]
    %v233 = vld [vmem:[#allocation2 + $0x178] sm:$0xf]
    %v234 = vld [vmem:[#allocation2 + $0x17c] sm:$0xf]
    %v235 = vld [vmem:[#allocation2 + $0x180] sm:$0xf]
    %v236 = vld [vmem:[#allocation2 + $0x184] sm:$0xf]
    %v237 = vld [vmem:[#allocation2 + $0x188] sm:$0xf]
    %v238 = vld [vmem:[#allocation2 + $0x18c] sm:$0xf]
    %v239 = vld [vmem:[#allocation2 + $0x190] sm:$0xf]
    %v240 = vld [vmem:[#allocation2 + $0x194] sm:$0xf]
    %v241 = vld [vmem:[#allocation2 + $0x198] sm:$0xf]
    %v242 = vld [vmem:[#allocation2 + $0x19c] sm:$0xf]
    %v243 = vld [vmem:[#allocation2 + $0x1a0] sm:$0xf]
    %v244 = vld [vmem:[#allocation2 + $0x1a4] sm:$0xf]
    %v245 = vld [vmem:[#allocation2 + $0x1a8] sm:$0xf]
    %v246 = vld [vmem:[#allocation2 + $0x1ac] sm:$0xf]
    %v247 = vld [vmem:[#allocation2 + $0x1b0] sm:$0xf]
    %v248 = vld [vmem:[#allocation2 + $0x1b4] sm:$0xf]
    %v249 = vld [vmem:[#allocation2 + $0x1b8] sm:$0xf]
    %v250 = vld [vmem:[#allocation2 + $0x1bc] sm:$0xf]
    %v251 = vld [vmem:[#allocation2 + $0x1c0] sm:$0xf]
    %v252 = vld [vmem:[#allocation2 + $0x1c4] sm:$0xf]
    %v253 = vld [vmem:[#allocation2 + $0x1c8] sm:$0xf]
    %v254 = vld [vmem:[#allocation2 + $0x1cc] sm:$0xf]
    %v255 = vld [vmem:[#allocation2 + $0x1d0] sm:$0xf]
    %v256 = vld [vmem:[#allocation2 + $0x1d4] sm:$0xf]
    %v257 = vld [vmem:[#allocation2 + $0x1d8] sm:$0xf]
    %v258 = vld [vmem:[#allocation2 + $0x1dc] sm:$0xf]
    %v259 = vld [vmem:[#allocation2 + $0x1e0] sm:$0xf]
    %v260 = vld [vmem:[#allocation2 + $0x1e4] sm:$0xf]
    %v261 = vld [vmem:[#allocation2 + $0x1e8] sm:$0xf]
    %v262 = vld [vmem:[#allocation2 + $0x1ec] sm:$0xf]
    %v263 = vld [vmem:[#allocation2 + $0x1f0] sm:$0xf]
    %v264 = vld [vmem:[#allocation2 + $0x1f4] sm:$0xf]
    %v265 = vld [vmem:[#allocation2 + $0x1f8] sm:$0xf]
    %v266 = vld [vmem:[#allocation2 + $0x1fc] sm:$0xf]
    %v267 = vld [vmem:[%s2] sm:$0x1]
    %v269 = vlaneseq
    %v270 = vshrl.u32 %v269, 7
    %v271 = vsub.s32 0, %v270
    %v272 = vrot.slane %v267, %v271
    %v402 = vunpack.c.l.b16 %v139
    %v403 = vunpack.c.l.b16 %v140
    %v404 = vunpack.c.l.b16 %v141
    %v405 = vunpack.c.l.b16 %v142
    %v406 = vunpack.c.l.b16 %v143
    %v407 = vunpack.c.l.b16 %v144
    %v408 = vunpack.c.l.b16 %v145
    %v409 = vunpack.c.l.b16 %v146
    %v410 = vunpack.c.l.b16 %v147
    %v411 = vunpack.c.l.b16 %v148
    %v412 = vunpack.c.l.b16 %v149
    %v413 = vunpack.c.l.b16 %v150
    %v414 = vunpack.c.l.b16 %v151
    %v415 = vunpack.c.l.b16 %v152
    %v416 = vunpack.c.l.b16 %v153
    %v417 = vunpack.c.l.b16 %v154
    %v418 = vunpack.c.l.b16 %v155
    %v419 = vunpack.c.l.b16 %v156
    %v420 = vunpack.c.l.b16 %v157
    %v421 = vunpack.c.l.b16 %v158
    %v422 = vunpack.c.l.b16 %v159
    %v423 = vunpack.c.l.b16 %v160
    %v424 = vunpack.c.l.b16 %v161
    %v425 = vunpack.c.l.b16 %v162
    %v426 = vunpack.c.l.b16 %v163
    %v427 = vunpack.c.l.b16 %v164
    %v428 = vunpack.c.l.b16 %v165
    %v429 = vunpack.c.l.b16 %v166
    %v430 = vunpack.c.l.b16 %v167
    %v431 = vunpack.c.l.b16 %v168
    %v432 = vunpack.c.l.b16 %v169
    %v433 = vunpack.c.l.b16 %v170
    %v434 = vunpack.c.l.b16 %v171
    %v435 = vunpack.c.l.b16 %v172
    %v436 = vunpack.c.l.b16 %v173
    %v437 = vunpack.c.l.b16 %v174
    %v438 = vunpack.c.l.b16 %v175
    %v439 = vunpack.c.l.b16 %v176
    %v440 = vunpack.c.l.b16 %v177
    %v441 = vunpack.c.l.b16 %v178
    %v442 = vunpack.c.l.b16 %v179
    %v443 = vunpack.c.l.b16 %v180
    %v444 = vunpack.c.l.b16 %v181
    %v445 = vunpack.c.l.b16 %v182
    %v446 = vunpack.c.l.b16 %v183
    %v447 = vunpack.c.l.b16 %v184
    %v448 = vunpack.c.l.b16 %v185
    %v449 = vunpack.c.l.b16 %v186
    %v450 = vunpack.c.l.b16 %v187
    %v451 = vunpack.c.l.b16 %v188
    %v452 = vunpack.c.l.b16 %v189
    %v453 = vunpack.c.l.b16 %v190
    %v454 = vunpack.c.l.b16 %v191
    %v455 = vunpack.c.l.b16 %v192
    %v456 = vunpack.c.l.b16 %v193
    %v457 = vunpack.c.l.b16 %v194
    %v458 = vunpack.c.l.b16 %v195
    %v459 = vunpack.c.l.b16 %v196
    %v460 = vunpack.c.l.b16 %v197
    %v461 = vunpack.c.l.b16 %v198
    %v462 = vunpack.c.l.b16 %v199
    %v463 = vunpack.c.l.b16 %v200
    %v464 = vunpack.c.l.b16 %v201
    %v465 = vunpack.c.l.b16 %v202
    %v466 = vunpack.c.l.b16 %v203
    %v467 = vunpack.c.l.b16 %v204
    %v468 = vunpack.c.l.b16 %v205
    %v469 = vunpack.c.l.b16 %v206
    %v470 = vunpack.c.l.b16 %v207
    %v471 = vunpack.c.l.b16 %v208
    %v472 = vunpack.c.l.b16 %v209
    %v473 = vunpack.c.l.b16 %v210
    %v474 = vunpack.c.l.b16 %v211
    %v475 = vunpack.c.l.b16 %v212
    %v476 = vunpack.c.l.b16 %v213
    %v477 = vunpack.c.l.b16 %v214
    %v478 = vunpack.c.l.b16 %v215
    %v479 = vunpack.c.l.b16 %v216
    %v480 = vunpack.c.l.b16 %v217
    %v481 = vunpack.c.l.b16 %v218
    %v482 = vunpack.c.l.b16 %v219
    %v483 = vunpack.c.l.b16 %v220
    %v484 = vunpack.c.l.b16 %v221
    %v485 = vunpack.c.l.b16 %v222
    %v486 = vunpack.c.l.b16 %v223
    %v487 = vunpack.c.l.b16 %v224
    %v488 = vunpack.c.l.b16 %v225
    %v489 = vunpack.c.l.b16 %v226
    %v490 = vunpack.c.l.b16 %v227
    %v491 = vunpack.c.l.b16 %v228
    %v492 = vunpack.c.l.b16 %v229
    %v493 = vunpack.c.l.b16 %v230
    %v494 = vunpack.c.l.b16 %v231
    %v495 = vunpack.c.l.b16 %v232
    %v496 = vunpack.c.l.b16 %v233
    %v497 = vunpack.c.l.b16 %v234
    %v498 = vunpack.c.l.b16 %v235
    %v499 = vunpack.c.l.b16 %v236
    %v500 = vunpack.c.l.b16 %v237
    %v501 = vunpack.c.l.b16 %v238
    %v502 = vunpack.c.l.b16 %v239
    %v503 = vunpack.c.l.b16 %v240
    %v504 = vunpack.c.l.b16 %v241
    %v505 = vunpack.c.l.b16 %v242
    %v506 = vunpack.c.l.b16 %v243
    %v507 = vunpack.c.l.b16 %v244
    %v508 = vunpack.c.l.b16 %v245
    %v509 = vunpack.c.l.b16 %v246
    %v510 = vunpack.c.l.b16 %v247
    %v511 = vunpack.c.l.b16 %v248
    %v512 = vunpack.c.l.b16 %v249
    %v513 = vunpack.c.l.b16 %v250
    %v514 = vunpack.c.l.b16 %v251
    %v515 = vunpack.c.l.b16 %v252
    %v516 = vunpack.c.l.b16 %v253
    %v517 = vunpack.c.l.b16 %v254
    %v518 = vunpack.c.l.b16 %v255
    %v519 = vunpack.c.l.b16 %v256
    %v520 = vunpack.c.l.b16 %v257
    %v521 = vunpack.c.l.b16 %v258
    %v522 = vunpack.c.l.b16 %v259
    %v523 = vunpack.c.l.b16 %v260
    %v524 = vunpack.c.l.b16 %v261
    %v525 = vunpack.c.l.b16 %v262
    %v526 = vunpack.c.l.b16 %v263
    %v527 = vunpack.c.l.b16 %v264
    %v528 = vunpack.c.l.b16 %v265
    %v529 = vunpack.c.l.b16 %v266
    %v530 = vpack.c.b16 %v403, %v402
    %v531 = vpack.c.b16 %v405, %v404
    %v532 = vpack.c.b16 %v407, %v406
    %v533 = vpack.c.b16 %v409, %v408
    %v534 = vpack.c.b16 %v411, %v410
    %v535 = vpack.c.b16 %v413, %v412
    %v536 = vpack.c.b16 %v415, %v414
    %v537 = vpack.c.b16 %v417, %v416
    %v538 = vpack.c.b16 %v419, %v418
    %v539 = vpack.c.b16 %v421, %v420
    %v540 = vpack.c.b16 %v423, %v422
    %v541 = vpack.c.b16 %v425, %v424
    %v542 = vpack.c.b16 %v427, %v426
    %v543 = vpack.c.b16 %v429, %v428
    %v544 = vpack.c.b16 %v431, %v430
    %v545 = vpack.c.b16 %v433, %v432
    %v546 = vpack.c.b16 %v435, %v434
    %v547 = vpack.c.b16 %v437, %v436
    %v548 = vpack.c.b16 %v439, %v438
    %v549 = vpack.c.b16 %v441, %v440
    %v550 = vpack.c.b16 %v443, %v442
    %v551 = vpack.c.b16 %v445, %v444
    %v552 = vpack.c.b16 %v447, %v446
    %v553 = vpack.c.b16 %v449, %v448
    %v554 = vpack.c.b16 %v451, %v450
    %v555 = vpack.c.b16 %v453, %v452
    %v556 = vpack.c.b16 %v455, %v454
    %v557 = vpack.c.b16 %v457, %v456
    %v558 = vpack.c.b16 %v459, %v458
    %v559 = vpack.c.b16 %v461, %v460
    %v560 = vpack.c.b16 %v463, %v462
    %v561 = vpack.c.b16 %v465, %v464
    %v562 = vpack.c.b16 %v467, %v466
    %v563 = vpack.c.b16 %v469, %v468
    %v564 = vpack.c.b16 %v471, %v470
    %v565 = vpack.c.b16 %v473, %v472
    %v566 = vpack.c.b16 %v475, %v474
    %v567 = vpack.c.b16 %v477, %v476
    %v568 = vpack.c.b16 %v479, %v478
    %v569 = vpack.c.b16 %v481, %v480
    %v570 = vpack.c.b16 %v483, %v482
    %v571 = vpack.c.b16 %v485, %v484
    %v572 = vpack.c.b16 %v487, %v486
    %v573 = vpack.c.b16 %v489, %v488
    %v574 = vpack.c.b16 %v491, %v490
    %v575 = vpack.c.b16 %v493, %v492
    %v576 = vpack.c.b16 %v495, %v494
    %v577 = vpack.c.b16 %v497, %v496
    %v578 = vpack.c.b16 %v499, %v498
    %v579 = vpack.c.b16 %v501, %v500
    %v580 = vpack.c.b16 %v503, %v502
    %v581 = vpack.c.b16 %v505, %v504
    %v582 = vpack.c.b16 %v507, %v506
    %v583 = vpack.c.b16 %v509, %v508
    %v584 = vpack.c.b16 %v511, %v510
    %v585 = vpack.c.b16 %v513, %v512
    %v586 = vpack.c.b16 %v515, %v514
    %v587 = vpack.c.b16 %v517, %v516
    %v588 = vpack.c.b16 %v519, %v518
    %v589 = vpack.c.b16 %v521, %v520
    %v590 = vpack.c.b16 %v523, %v522
    %v591 = vpack.c.b16 %v525, %v524
    %v592 = vpack.c.b16 %v527, %v526
    %v593 = vpack.c.b16 %v529, %v528
    %658 = vmatprep.subr.bf16.mxu0 0
    %659 = vmatpush1.bf16.msra.mxu0 %v537
    %660 = vmatprep.subr.bf16.mxu0 0
    %661 = vmatpush1.bf16.msra.mxu0 %v536
    %662 = vmatprep.subr.bf16.mxu0 0
    %663 = vmatpush1.bf16.msra.mxu0 %v535
    %664 = vmatprep.subr.bf16.mxu0 0
    %665 = vmatpush1.bf16.msra.mxu0 %v534
    %666 = vmatprep.subr.bf16.mxu0 0
    %667 = vmatpush1.bf16.msra.mxu0 %v533
    %668 = vmatprep.subr.bf16.mxu0 0
    %669 = vmatpush1.bf16.msra.mxu0 %v532
    %670 = vmatprep.subr.bf16.mxu0 0
    %671 = vmatpush1.bf16.msra.mxu0 %v531
    %672 = vmatprep.subr.bf16.mxu0 0
    %673 = vmatpush1.bf16.msra.mxu0 %v530
    %674 = vmatprep.subr.bf16.mxu0 0
    %675 = vmatpush2.bf16.msra.mxu0 %v545
    %676 = vmatprep.subr.bf16.mxu0 0
    %677 = vmatpush2.bf16.msra.mxu0 %v544
    %678 = vmatprep.subr.bf16.mxu0 0
    %679 = vmatpush2.bf16.msra.mxu0 %v543
    %680 = vmatprep.subr.bf16.mxu0 0
    %681 = vmatpush2.bf16.msra.mxu0 %v542
    %682 = vmatprep.subr.bf16.mxu0 0
    %683 = vmatpush2.bf16.msra.mxu0 %v541
    %684 = vmatprep.subr.bf16.mxu0 0
    %685 = vmatpush2.bf16.msra.mxu0 %v540
    %686 = vmatprep.subr.bf16.mxu0 0
    %687 = vmatpush2.bf16.msra.mxu0 %v539
    %688 = vmatprep.subr.bf16.mxu0 0
    %689 = vmatpush2.bf16.msra.mxu0 %v538
    %690 = vmatprep.mubr.bf16.mxu0 %v132
    %691 = vmatmul.mubr.bf16.gmra.mxu0 %v131
    %v692 = vpop.f32.mrf.mxu0
    %v693 = vadd.f32 %v272, %v692
    %v694 = vpop.f32.mrf.mxu0
    %v695 = vpop.f32.mrf.mxu0
    %v696 = vpop.f32.mrf.mxu0
    %697 = vdwg.mxu0
    %698 = vmatprep.subr.bf16.mxu0 0
    %699 = vmatpush1.bf16.msra.mxu0 %v553
    %700 = vmatprep.subr.bf16.mxu0 0
    %701 = vmatpush1.bf16.msra.mxu0 %v552
    %702 = vmatprep.subr.bf16.mxu0 0
    %703 = vmatpush1.bf16.msra.mxu0 %v551
    %704 = vmatprep.subr.bf16.mxu0 0
    %705 = vmatpush1.bf16.msra.mxu0 %v550
    %706 = vmatprep.subr.bf16.mxu0 0
    %707 = vmatpush1.bf16.msra.mxu0 %v549
    %708 = vmatprep.subr.bf16.mxu0 0
    %709 = vmatpush1.bf16.msra.mxu0 %v548
    %710 = vmatprep.subr.bf16.mxu0 0
    %711 = vmatpush1.bf16.msra.mxu0 %v547
    %712 = vmatprep.subr.bf16.mxu0 0
    %713 = vmatpush1.bf16.msra.mxu0 %v546
    %714 = vmatprep.subr.bf16.mxu0 0
    %715 = vmatpush2.bf16.msra.mxu0 %v561
    %716 = vmatprep.subr.bf16.mxu0 0
    %717 = vmatpush2.bf16.msra.mxu0 %v560
    %718 = vmatprep.subr.bf16.mxu0 0
    %719 = vmatpush2.bf16.msra.mxu0 %v559
    %720 = vmatprep.subr.bf16.mxu0 0
    %721 = vmatpush2.bf16.msra.mxu0 %v558
    %722 = vmatprep.subr.bf16.mxu0 0
    %723 = vmatpush2.bf16.msra.mxu0 %v557
    %724 = vmatprep.subr.bf16.mxu0 0
    %725 = vmatpush2.bf16.msra.mxu0 %v556
    %726 = vmatprep.subr.bf16.mxu0 0
    %727 = vmatpush2.bf16.msra.mxu0 %v555
    %728 = vmatprep.subr.bf16.mxu0 0
    %729 = vmatpush2.bf16.msra.mxu0 %v554
    %730 = vmatprep.mubr.bf16.mxu0 %v134
    %731 = vmatmul.mubr.bf16.gmra.mxu0 %v133
    %v732 = vpop.f32.mrf.mxu0
    %v733 = vadd.f32 %v693, %v732
    %v734 = vpop.f32.mrf.mxu0
    %v735 = vpop.f32.mrf.mxu0
    %v736 = vpop.f32.mrf.mxu0
    %737 = vdwg.mxu0
    %738 = vmatprep.subr.bf16.mxu0 0
    %739 = vmatpush1.bf16.msra.mxu0 %v569
    %740 = vmatprep.subr.bf16.mxu0 0
    %741 = vmatpush1.bf16.msra.mxu0 %v568
    %742 = vmatprep.subr.bf16.mxu0 0
    %743 = vmatpush1.bf16.msra.mxu0 %v567
    %744 = vmatprep.subr.bf16.mxu0 0
    %745 = vmatpush1.bf16.msra.mxu0 %v566
    %746 = vmatprep.subr.bf16.mxu0 0
    %747 = vmatpush1.bf16.msra.mxu0 %v565
    %748 = vmatprep.subr.bf16.mxu0 0
    %749 = vmatpush1.bf16.msra.mxu0 %v564
    %750 = vmatprep.subr.bf16.mxu0 0
    %751 = vmatpush1.bf16.msra.mxu0 %v563
    %752 = vmatprep.subr.bf16.mxu0 0
    %753 = vmatpush1.bf16.msra.mxu0 %v562
    %754 = vmatprep.subr.bf16.mxu0 0
    %755 = vmatpush2.bf16.msra.mxu0 %v577
    %756 = vmatprep.subr.bf16.mxu0 0
    %757 = vmatpush2.bf16.msra.mxu0 %v576
    %758 = vmatprep.subr.bf16.mxu0 0
    %759 = vmatpush2.bf16.msra.mxu0 %v575
    %760 = vmatprep.subr.bf16.mxu0 0
    %761 = vmatpush2.bf16.msra.mxu0 %v574
    %762 = vmatprep.subr.bf16.mxu0 0
    %763 = vmatpush2.bf16.msra.mxu0 %v573
    %764 = vmatprep.subr.bf16.mxu0 0
    %765 = vmatpush2.bf16.msra.mxu0 %v572
    %766 = vmatprep.subr.bf16.mxu0 0
    %767 = vmatpush2.bf16.msra.mxu0 %v571
    %768 = vmatprep.subr.bf16.mxu0 0
    %769 = vmatpush2.bf16.msra.mxu0 %v570
    %770 = vmatprep.mubr.bf16.mxu0 %v136
    %771 = vmatmul.mubr.bf16.gmra.mxu0 %v135
    %v772 = vpop.f32.mrf.mxu0
    %v773 = vadd.f32 %v733, %v772
    %v774 = vpop.f32.mrf.mxu0
    %v775 = vpop.f32.mrf.mxu0
    %v776 = vpop.f32.mrf.mxu0
    %777 = vdwg.mxu0
    %778 = vmatprep.subr.bf16.mxu0 0
    %779 = vmatpush1.bf16.msra.mxu0 %v585
    %780 = vmatprep.subr.bf16.mxu0 0
    %781 = vmatpush1.bf16.msra.mxu0 %v584
    %782 = vmatprep.subr.bf16.mxu0 0
    %783 = vmatpush1.bf16.msra.mxu0 %v583
    %784 = vmatprep.subr.bf16.mxu0 0
    %785 = vmatpush1.bf16.msra.mxu0 %v582
    %786 = vmatprep.subr.bf16.mxu0 0
    %787 = vmatpush1.bf16.msra.mxu0 %v581
    %788 = vmatprep.subr.bf16.mxu0 0
    %789 = vmatpush1.bf16.msra.mxu0 %v580
    %790 = vmatprep.subr.bf16.mxu0 0
    %791 = vmatpush1.bf16.msra.mxu0 %v579
    %792 = vmatprep.subr.bf16.mxu0 0
    %793 = vmatpush1.bf16.msra.mxu0 %v578
    %794 = vmatprep.subr.bf16.mxu0 0
    %795 = vmatpush2.bf16.msra.mxu0 %v593
    %796 = vmatprep.subr.bf16.mxu0 0
    %797 = vmatpush2.bf16.msra.mxu0 %v592
    %798 = vmatprep.subr.bf16.mxu0 0
    %799 = vmatpush2.bf16.msra.mxu0 %v591
    %800 = vmatprep.subr.bf16.mxu0 0
    %801 = vmatpush2.bf16.msra.mxu0 %v590
    %802 = vmatprep.subr.bf16.mxu0 0
    %803 = vmatpush2.bf16.msra.mxu0 %v589
    %804 = vmatprep.subr.bf16.mxu0 0
    %805 = vmatpush2.bf16.msra.mxu0 %v588
    %806 = vmatprep.subr.bf16.mxu0 0
    %807 = vmatpush2.bf16.msra.mxu0 %v587
    %808 = vmatprep.subr.bf16.mxu0 0
    %809 = vmatpush2.bf16.msra.mxu0 %v586
    %810 = vmatprep.mubr.bf16.mxu0 %v138
    %811 = vmatmul.mubr.bf16.gmra.mxu0 %v137
    %v812 = vpop.f32.mrf.mxu0
    %v813 = vadd.f32 %v773, %v812
    %v814 = vpop.f32.mrf.mxu0
    %v815 = vpop.f32.mrf.mxu0
    %v816 = vpop.f32.mrf.mxu0
    %817 = vdwg.mxu0
    %818 = vmax.xlane.f32.xlu0 %v813
    %v819 = vpop.xlane.xlu0 %818
    %v820 = vsub.f32 %v813, %v819
    %v821 = vmul.f32 %v820, 1.442695
    %v822 = vpow.pop %v821
    %823 = vadd.xlane.f32.xlu0 %v822
    %v824 = vpop.xlane.xlu0 %823
    %v825 = vrcp.pop %v824
    %v826 = vmul.f32 %v822, %v825
    %v827 = vld [vmem:[%s3] sm:$0xff]
    %v828 = vld [vmem:[%s3 + $0x8] sm:$0xff]
    %v829 = vld [vmem:[%s3 + $0x10] sm:$0xff]
    %v830 = vld [vmem:[%s3 + $0x18] sm:$0xff]
    %v831 = vld [vmem:[%s3 + $0x20] sm:$0xff]
    %v832 = vld [vmem:[%s3 + $0x28] sm:$0xff]
    %v833 = vld [vmem:[%s3 + $0x30] sm:$0xff]
    %v834 = vld [vmem:[%s3 + $0x38] sm:$0xff]
    %v835 = vld [vmem:[%s3 + $0x40] sm:$0xff]
    %v836 = vld [vmem:[%s3 + $0x48] sm:$0xff]
    %v837 = vld [vmem:[%s3 + $0x50] sm:$0xff]
    %v838 = vld [vmem:[%s3 + $0x58] sm:$0xff]
    %v839 = vld [vmem:[%s3 + $0x60] sm:$0xff]
    %v840 = vld [vmem:[%s3 + $0x68] sm:$0xff]
    %v841 = vld [vmem:[%s3 + $0x70] sm:$0xff]
    %v842 = vld [vmem:[%s3 + $0x78] sm:$0xff]
    %v843 = vld [vmem:[%s4] sm:$0x1]
    %v845 = vlaneseq
    %v846 = vshrl.u32 %v845, 7
    %v847 = vsub.s32 0, %v846
    %v848 = vrot.slane %v843, %v847
    %850 = vmatprep.subr.mxu0 0.0
    %851 = vmatpush1.msra.mxu0 %v842
    %852 = vmatprep.subr.mxu0 0.0
    %853 = vmatpush1.msra.mxu0 %v841
    %854 = vmatprep.subr.mxu0 0.0
    %855 = vmatpush1.msra.mxu0 %v840
    %856 = vmatprep.subr.mxu0 0.0
    %857 = vmatpush1.msra.mxu0 %v839
    %858 = vmatprep.subr.mxu0 0.0
    %859 = vmatpush1.msra.mxu0 %v838
    %860 = vmatprep.subr.mxu0 0.0
    %861 = vmatpush1.msra.mxu0 %v837
    %862 = vmatprep.subr.mxu0 0.0
    %863 = vmatpush1.msra.mxu0 %v836
    %864 = vmatprep.subr.mxu0 0.0
    %865 = vmatpush1.msra.mxu0 %v835
    %866 = vmatprep.subr.mxu0 0.0
    %867 = vmatpush1.msra.mxu0 %v834
    %868 = vmatprep.subr.mxu0 0.0
    %869 = vmatpush1.msra.mxu0 %v833
    %870 = vmatprep.subr.mxu0 0.0
    %871 = vmatpush1.msra.mxu0 %v832
    %872 = vmatprep.subr.mxu0 0.0
    %873 = vmatpush1.msra.mxu0 %v831
    %874 = vmatprep.subr.mxu0 0.0
    %875 = vmatpush1.msra.mxu0 %v830
    %876 = vmatprep.subr.mxu0 0.0
    %877 = vmatpush1.msra.mxu0 %v829
    %878 = vmatprep.subr.mxu0 0.0
    %879 = vmatpush1.msra.mxu0 %v828
    %880 = vmatprep.subr.mxu0 0.0
    %881 = vmatpush1.msra.mxu0 %v827
    %882 = vmatprep.subr.mxu0 0.0
    %883 = vmatpush2.msra.mxu0 0.0
    %884 = vmatprep.subr.mxu0 0.0
    %885 = vmatpush2.msra.mxu0 0.0
    %886 = vmatprep.subr.mxu0 0.0
    %887 = vmatpush2.msra.mxu0 0.0
    %888 = vmatprep.subr.mxu0 0.0
    %889 = vmatpush2.msra.mxu0 0.0
    %890 = vmatprep.subr.mxu0 0.0
    %891 = vmatpush2.msra.mxu0 0.0
    %892 = vmatprep.subr.mxu0 0.0
    %893 = vmatpush2.msra.mxu0 0.0
    %894 = vmatprep.subr.mxu0 0.0
    %895 = vmatpush2.msra.mxu0 0.0
    %896 = vmatprep.subr.mxu0 0.0
    %897 = vmatpush2.msra.mxu0 0.0
    %898 = vmatprep.subr.mxu0 0.0
    %899 = vmatpush2.msra.mxu0 0.0
    %900 = vmatprep.subr.mxu0 0.0
    %901 = vmatpush2.msra.mxu0 0.0
    %902 = vmatprep.subr.mxu0 0.0
    %903 = vmatpush2.msra.mxu0 0.0
    %904 = vmatprep.subr.mxu0 0.0
    %905 = vmatpush2.msra.mxu0 0.0
    %906 = vmatprep.subr.mxu0 0.0
    %907 = vmatpush2.msra.mxu0 0.0
    %908 = vmatprep.subr.mxu0 0.0
    %909 = vmatpush2.msra.mxu0 0.0
    %910 = vmatprep.subr.mxu0 0.0
    %911 = vmatpush2.msra.mxu0 0.0
    %912 = vmatprep.subr.mxu0 0.0
    %913 = vmatpush2.msra.mxu0 0.0
    %914 = vmatprep.mubr.f32.mxu0 0.0
    %915 = vmatmul.mubr.f32.gmra.mxu0 %v826
    %v916 = vpop.f32.mrf.mxu0
    %v917 = vadd.f32 %v848, %v916
    %v918 = vpop.f32.mrf.mxu0
    %919 = vdwg.mxu0
    %v920 = vpack.c.bf16 %v917, %v917
    %v923 = vunpack.c.l.s4 1966171168
    %v924 = vunpack.c.0.s8 %v923
    %v925 = vlaneseq
    %v926 = vshrl.u32 %v925, 7
    %v927 = vsub.s32 %v924, %v926
    %v928 = vrot.slane %v920, %v927
    %v929 = vcombine.high %v928, %v928
    %v931 = vunpack.c.l.s4 1966171168
    %v932 = vunpack.c.0.s8 %v931
    %v933 = vlaneseq
    %v934 = vshrl.u32 %v933, 7
    %v935 = vsub.s32 %v932, %v934
    %v936 = vrot.slane %v928, %v935
    %v938 = vunpack.c.l.s4 1966171168
    %v939 = vunpack.c.0.s8 %v938
    %v940 = vlaneseq
    %v941 = vshrl.u32 %v940, 7
    %v942 = vsub.s32 %v939, %v941
    %v943 = vrot.slane %v929, %v942
    %v944 = vcombine.high %v936, %v936
    %v945 = vcombine.high %v943, %v943
    %950 = vst [vmem:[#allocation4] sm:$0x1] %v936
    %951 = vst [vmem:[#allocation4 + $0x1] sm:$0x1] %v943
    %952 = vst [vmem:[#allocation4 + $0x2] sm:$0x1] %v944
    %953 = vst [vmem:[#allocation4 + $0x3] sm:$0x1] %v945
    // Predicated region
    $region26: #{fully_connect_net_forward.1} parent=1 // pred_check
      _
    $region27: #{fully_connect_net_forward.1} parent=1 // pred_check_branch
      %955 = sbr.rel (0) target = $region29
    $region28: #{fully_connect_net_forward.1} parent=1 // pred_region
      // Predicated region
      $region30: #{fully_connect_net_forward.1} parent=28 // pred_check
        _
      $region31: #{fully_connect_net_forward.1} parent=28 // pred_check_branch
        %957 = sbr.rel (0) target = $region33
      $region32: #{fully_connect_net_forward.1} parent=28 // pred_region
        // Predicated region
        $region34: #{fully_connect_net_forward.1} parent=32 // pred_check
          _
        $region35: #{fully_connect_net_forward.1} parent=32 // pred_check_branch
          %959 = sbr.rel target = $region37
        $region36: #{fully_connect_net_forward.1} parent=32 // pred_region
          // Predicated region
          $region49: #{fully_connect_net_forward.1} parent=36 // pred_check
            _
          $region50: #{fully_connect_net_forward.1} parent=36 // pred_check_branch
            %975 = sbr.rel (0) target = $region52
          $region51: #{fully_connect_net_forward.1} parent=36 // pred_region
            %s977 = ssub.s32 2, 1
            loop: start=0, step=1, limit=1
            $region53: #{fully_connect_net_forward.1} parent=51 // loop_pre_header
              _
            $region54: #{fully_connect_net_forward.1} parent=51 // loop_header
              %s979 = sphi 0, %s983
              %p980 = scmp.ge.s32.totalorder %s979, 1
              %s984 = sphi [#allocation4], [#allocation4]
              %s985 = sphi %s5, %s5
            $region55: #{fully_connect_net_forward.1} parent=51 // loop_header_branch
              %982 = sbr.rel (%p980) target = $region59
            $region56: #{fully_connect_net_forward.1} parent=51 // loop_body
              %v986 = vld [vmem:[%s984] sm:%s977]
              %987 = vst [vmem:[%s985] sm:%s977] %v986
            $region57: #{fully_connect_net_forward.1} parent=51 // loop_footer
              %s983 = sadd.s32 1, %s979
            $region58: #{fully_connect_net_forward.1} parent=51 // loop_footer_branch
              %978 = sbr.rel target = $region54
            $region59: #{fully_connect_net_forward.1} parent=51 // loop_exit
              _
          $region52: #{fully_connect_net_forward.1} parent=36 // pred_fallthru
            _
        $region37: #{fully_connect_net_forward.1} parent=32 // pred_fallthru
          _
        // Predicated region
        $region38: #{fully_connect_net_forward.1} parent=32 // pred_check
          _
        $region39: #{fully_connect_net_forward.1} parent=32 // pred_check_branch
          %961 = sbr.rel (0) target = $region41
        $region40: #{fully_connect_net_forward.1} parent=32 // pred_region
          %s963 = ssub.s32 2, 1
          loop: start=0, step=1, limit=1
          $region42: #{fully_connect_net_forward.1} parent=40 // loop_pre_header
            _
          $region43: #{fully_connect_net_forward.1} parent=40 // loop_header
            %s965 = sphi 0, %s969
            %p966 = scmp.ge.s32.totalorder %s965, 1
            %s970 = sphi [#allocation4], [#allocation4]
            %s971 = sphi %s5, %s5
          $region44: #{fully_connect_net_forward.1} parent=40 // loop_header_branch
            %968 = sbr.rel (%p966) target = $region48
          $region45: #{fully_connect_net_forward.1} parent=40 // loop_body
            %v972 = vld [vmem:[%s970] sm:%s963]
            %973 = vst [vmem:[%s971] sm:%s963] %v972
          $region46: #{fully_connect_net_forward.1} parent=40 // loop_footer
            %s969 = sadd.s32 1, %s965
          $region47: #{fully_connect_net_forward.1} parent=40 // loop_footer_branch
            %964 = sbr.rel target = $region43
          $region48: #{fully_connect_net_forward.1} parent=40 // loop_exit
            _
        $region41: #{fully_connect_net_forward.1} parent=32 // pred_fallthru
          _
      $region33: #{fully_connect_net_forward.1} parent=28 // pred_fallthru
        _
      %988 = vnop
    $region29: #{fully_connect_net_forward.1} parent=1 // pred_fallthru
      _
    // Predicated region
    $region60: #{fully_connect_net_forward.1} parent=1 // pred_check
      _
    $region61: #{fully_connect_net_forward.1} parent=1 // pred_check_branch
      %990 = sbr.rel (0) target = $region63
    $region62: #{fully_connect_net_forward.1} parent=1 // pred_region
      _
    $region63: #{fully_connect_net_forward.1} parent=1 // pred_fallthru
      _
    %991 = vsyncpa [#allocation3], 1

</llo_original>
